<compile_context>
chip_gen: v7x
topology: tpu7x:2x2x1
jax: 0.10.0
libtpu: 0.0.40
codegen_flags: <defaults>
</compile_context>

<pallas_src>
import functools

import jax
import jax.numpy as jnp
from jax.experimental import pallas as pl
from jax.experimental.pallas import tpu as pltpu


_T_PAD = 1.0e17   # sentinel for padded template points
_S_PAD = -1.0e17  # sentinel for padded source points (different sign so a
                  # padded x padded pair never produces distance 0)

_LANE = 128       # template tile (sublane rows of the distance tile)
_CHUNK = 128      # source lanes processed per unrolled inner step


def _round_up(x, m):
    return ((x + m - 1) // m) * m


def _chamfer_kernel(t_ref, s_ref, d0_ref, d1_ref, d1_buf, *, chunk, n_chunks):
    # t_ref:  (1, tn, 3)            template points, coords on trailing dim
    # s_ref:  (1, 3, m_block)       source points, lane-dense along points
    # d0_ref: (1, grid_n, tn)       per-batch resident, lane-dense rows
    # d1_ref: (1, grid_mo, m_block) per-batch resident, lane-dense rows
    # d1_buf: (1, m_block)          VMEM scratch assembling this step's d1 row
    n = pl.program_id(1)
    mo = pl.program_id(2)
    tn = t_ref.shape[1]

    # Hoisted template coordinate columns (tn, 1) -- loaded once per step.
    tx = t_ref[0, :, 0:1]
    ty = t_ref[0, :, 1:2]
    tz = t_ref[0, :, 2:3]

    # Running elementwise min over source chunks; reduced to a row at the end.
    d0_part = jnp.full((tn, chunk), jnp.inf, dtype=jnp.float32)

    # Fully-unrolled static loop over lane-aligned source sub-chunks.  All
    # offsets are Python constants, so every slice below is static/aligned.
    for c in range(n_chunks):
        off = c * chunk
        sx = s_ref[0, 0:1, off:off + chunk]   # (1, chunk) lane-dense
        sy = s_ref[0, 1:2, off:off + chunk]
        sz = s_ref[0, 2:3, off:off + chunk]
        dx = tx - sx
        dy = ty - sy
        dz = tz - sz
        dist = dx * dx + dy * dy + dz * dz    # (tn, chunk), pure VPU math
        d0_part = jnp.minimum(d0_part, dist)
        # Per-chunk min over template points -> lane-dense (1, chunk) partial.
        d1_buf[:, off:off + chunk] = jnp.min(dist, axis=0, keepdims=True)

    # Lane-dense d0 row for this template tile: one (chunk, tn) XLU transpose
    # plus a sublane min-reduce (both off the binding VALU slot).
    d0_row = jnp.min(d0_part.T, axis=0, keepdims=True)   # (1, tn)
    d1_row = d1_buf[...]                                  # (1, m_block)

    # d0: running min across source blocks (mo axis).  Write directly on the
    # first block instead of inf-init + reload-and-min.
    @pl.when(mo == 0)
    def _():
        d0_ref[0, pl.ds(n, 1), :] = d0_row

    @pl.when(mo > 0)
    def _():
        d0_ref[0, pl.ds(n, 1), :] = jnp.minimum(d0_ref[0, pl.ds(n, 1), :], d0_row)

    # d1: running min across template tiles (n axis).
    @pl.when(n == 0)
    def _():
        d1_ref[0, pl.ds(mo, 1), :] = d1_row

    @pl.when(n > 0)
    def _():
        d1_ref[0, pl.ds(mo, 1), :] = jnp.minimum(d1_ref[0, pl.ds(mo, 1), :], d1_row)


def chamfer_pairwise_min(template, source, *, tile_m=2048):
    """template: (B, N, 3), source: (B, M, 3) -> (d0: (B, N), d1: (B, M))."""
    template = jnp.asarray(template, jnp.float32)
    source = jnp.asarray(source, jnp.float32)
    B, N, dt = template.shape
    B2, M, ds_ = source.shape
    assert dt == 3 and ds_ == 3 and B == B2

    tn = _LANE                                    # fixed so the d0 transpose is (128, 128)
    n_pad = _round_up(N, tn)
    grid_n = n_pad // tn

    m_block = min(tile_m, _round_up(M, _CHUNK))   # source block held in VMEM per step
    m_pad = _round_up(M, m_block)
    grid_mo = m_pad // m_block
    n_chunks = m_block // _CHUNK

    # Sentinel padding: padded points lose every min for free, so the kernel
    # needs no iota/compare/select masking.  Values are large enough to never
    # beat a real pair yet small enough that squared sums stay finite in f32.
    t_p = jnp.pad(template, ((0, 0), (0, n_pad - N), (0, 0)), constant_values=_T_PAD)
    s_p = jnp.pad(source, ((0, 0), (0, m_pad - M), (0, 0)), constant_values=_S_PAD)
    s_p = jnp.transpose(s_p, (0, 2, 1))           # (B, 3, m_pad): points on lanes

    kernel = functools.partial(_chamfer_kernel, chunk=_CHUNK, n_chunks=n_chunks)

    d0, d1 = pl.pallas_call(
        kernel,
        out_shape=(
            jax.ShapeDtypeStruct((B, grid_n, tn), jnp.float32),
            jax.ShapeDtypeStruct((B, grid_mo, m_block), jnp.float32),
        ),
        grid_spec=pltpu.PrefetchScalarGridSpec(
            num_scalar_prefetch=0,
            grid=(B, grid_n, grid_mo),
            in_specs=[
                pl.BlockSpec((1, tn, 3), lambda b, n, m: (b, n, 0)),
                pl.BlockSpec((1, 3, m_block), lambda b, n, m: (b, 0, m)),
            ],
            out_specs=[
                # Both outputs stay VMEM-resident for a whole batch step and
                # are written back to HBM once per batch.
                pl.BlockSpec((1, grid_n, tn), lambda b, n, m: (b, 0, 0)),
                pl.BlockSpec((1, grid_mo, m_block), lambda b, n, m: (b, 0, 0)),
            ],
            scratch_shapes=[pltpu.VMEM((1, m_block), jnp.float32)],
        ),
        compiler_params=pltpu.CompilerParams(
            # n and mo are reduction axes for d1 / d0 respectively -> arbitrary.
            # TODO(synk): for v7x with B == 1, restructure d1 into per-n
            # partials so the n axis can be marked parallel (2 TensorCores).
            dimension_semantics=("parallel", "arbitrary", "arbitrary"),
            vmem_limit_bytes=32 * 1024 * 1024,   # explicit; fits v7x's 64 MiB too
        ),
        cost_estimate=pl.CostEstimate(
            flops=8 * B * n_pad * m_pad,
            transcendentals=0,
            bytes_accessed=4 * B * (3 * n_pad + 3 * m_pad * grid_n + n_pad + m_pad),
        ),
    )(t_p, s_p)

    d0 = d0.reshape(B, n_pad)[:, :N]
    d1 = d1.reshape(B, m_pad)[:, :M]
    return d0, d1


def chamfer_distance_loss(template, source):
    """JAX equivalent of ChamferDistanceLoss.forward(template, source)."""
    d0, d1 = chamfer_pairwise_min(template, source)
    # TODO(synk): forward-only; if differentiated, use sqrt(d + eps) to avoid
    # the infinite gradient of sqrt at coincident points.
    cost_p0_p1 = jnp.mean(jnp.sqrt(d0))
    cost_p1_p0 = jnp.mean(jnp.sqrt(d1))
    return (cost_p0_p1 + cost_p1_p0) / 2.0


def _reference_loss(template, source):
    # Pure-JAX reference for a sanity check.
    diff = template[:, :, None, :] - source[:, None, :, :]   # (B, N, M, 3)
    dist = jnp.sum(diff * diff, axis=-1)                      # (B, N, M)
    d0 = jnp.min(dist, axis=2)
    d1 = jnp.min(dist, axis=1)
    return (jnp.mean(jnp.sqrt(d0)) + jnp.mean(jnp.sqrt(d1))) / 2.0


if __name__ == "__main__":
    key = jax.random.PRNGKey(0)
    loss_fn = jax.jit(chamfer_distance_loss)

    # Exact tile multiples, ragged sizes, and a multi-block / multi-chunk case.
    for (B, N, M) in [(2, 128, 128), (2, 200, 160), (1, 300, 2200)]:
        k1, k2 = jax.random.split(jax.random.fold_in(key, N * 10000 + M))
        template = jax.random.normal(k1, (B, N, 3), dtype=jnp.float32)
        source = jax.random.normal(k2, (B, M, 3), dtype=jnp.float32)

        loss = loss_fn(template, source)
        jax.block_until_ready(loss)

        ref = _reference_loss(template, source)
        assert jnp.allclose(loss, ref, rtol=1e-5, atol=1e-6), (B, N, M, loss, ref)

    print("KERNEL_OK")
</pallas_src>

<mosaic_0001>
module attributes {stable_mosaic.version = 11 : i64} {
  func.func @_chamfer_kernel(%arg0: i32, %arg1: i32, %arg2: i32, %arg3: memref<1x128x3xf32, #tpu.memory_space<vmem>>, %arg4: memref<1x3x128xf32, #tpu.memory_space<vmem>>, %arg5: memref<1x1x128xf32, #tpu.memory_space<vmem>>, %arg6: memref<1x1x128xf32, #tpu.memory_space<vmem>>, %arg7: memref<1x128xf32, #tpu.memory_space<vmem>>) attributes {dimension_semantics = [#tpu.dimension_semantics<parallel>, #tpu.dimension_semantics<arbitrary>, #tpu.dimension_semantics<arbitrary>], iteration_bounds = array<i64: 2, 1, 1>, scalar_prefetch = 0 : i64, scratch_operands = 1 : i64, tpu.core_type = #tpu.core_type<tc>, window_params = [{transform_indices = @transform_0, window_bounds = array<i64: 1, 128, 3>}, {transform_indices = @transform_1, window_bounds = array<i64: 1, 3, 128>}, {transform_indices = @transform_2, window_bounds = array<i64: 1, 1, 128>}, {transform_indices = @transform_3, window_bounds = array<i64: 1, 1, 128>}]} {
    %c0 = arith.constant 0 : index
    %c0_0 = arith.constant 0 : index
    %c0_1 = arith.constant 0 : index
    %0 = vector.load %arg3[%c0, %c0_0, %c0_1] : memref<1x128x3xf32, #tpu.memory_space<vmem>>, vector<1x128x1xf32>
    %1 = vector.shape_cast %0 : vector<1x128x1xf32> to vector<128x1xf32>
    %c0_2 = arith.constant 0 : index
    %c0_3 = arith.constant 0 : index
    %c1 = arith.constant 1 : index
    %2 = vector.load %arg3[%c0_2, %c0_3, %c1] : memref<1x128x3xf32, #tpu.memory_space<vmem>>, vector<1x128x1xf32>
    %3 = vector.shape_cast %2 : vector<1x128x1xf32> to vector<128x1xf32>
    %c0_4 = arith.constant 0 : index
    %c0_5 = arith.constant 0 : index
    %c2 = arith.constant 2 : index
    %4 = vector.load %arg3[%c0_4, %c0_5, %c2] : memref<1x128x3xf32, #tpu.memory_space<vmem>>, vector<1x128x1xf32>
    %5 = vector.shape_cast %4 : vector<1x128x1xf32> to vector<128x1xf32>
    %cst = arith.constant 0x7F800000 : f32
    %6 = vector.broadcast %cst : f32 to vector<128x128xf32>
    %c0_6 = arith.constant 0 : index
    %c0_7 = arith.constant 0 : index
    %c0_8 = arith.constant 0 : index
    %7 = vector.load %arg4[%c0_6, %c0_7, %c0_8] : memref<1x3x128xf32, #tpu.memory_space<vmem>>, vector<1x1x128xf32>
    %8 = vector.shape_cast %7 : vector<1x1x128xf32> to vector<1x128xf32>
    %c0_9 = arith.constant 0 : index
    %c1_10 = arith.constant 1 : index
    %c0_11 = arith.constant 0 : index
    %9 = vector.load %arg4[%c0_9, %c1_10, %c0_11] : memref<1x3x128xf32, #tpu.memory_space<vmem>>, vector<1x1x128xf32>
    %10 = vector.shape_cast %9 : vector<1x1x128xf32> to vector<1x128xf32>
    %c0_12 = arith.constant 0 : index
    %c2_13 = arith.constant 2 : index
    %c0_14 = arith.constant 0 : index
    %11 = vector.load %arg4[%c0_12, %c2_13, %c0_14] : memref<1x3x128xf32, #tpu.memory_space<vmem>>, vector<1x1x128xf32>
    %12 = vector.shape_cast %11 : vector<1x1x128xf32> to vector<1x128xf32>
    %13 = vector.broadcast %1 : vector<128x1xf32> to vector<128x128xf32>
    %14 = vector.broadcast %8 : vector<1x128xf32> to vector<128x128xf32>
    %15 = arith.subf %13, %14 : vector<128x128xf32>
    %16 = vector.broadcast %3 : vector<128x1xf32> to vector<128x128xf32>
    %17 = vector.broadcast %10 : vector<1x128xf32> to vector<128x128xf32>
    %18 = arith.subf %16, %17 : vector<128x128xf32>
    %19 = vector.broadcast %5 : vector<128x1xf32> to vector<128x128xf32>
    %20 = vector.broadcast %12 : vector<1x128xf32> to vector<128x128xf32>
    %21 = arith.subf %19, %20 : vector<128x128xf32>
    %22 = arith.mulf %15, %15 : vector<128x128xf32>
    %23 = arith.mulf %18, %18 : vector<128x128xf32>
    %24 = arith.addf %22, %23 : vector<128x128xf32>
    %25 = arith.mulf %21, %21 : vector<128x128xf32>
    %26 = arith.addf %24, %25 : vector<128x128xf32>
    %27 = arith.minimumf %6, %26 : vector<128x128xf32>
    %cst_15 = arith.constant dense<0x7F800000> : vector<128xf32>
    %28 = vector.multi_reduction <minimumf>, %26, %cst_15 [0] : vector<128x128xf32> to vector<128xf32>
    %29 = vector.shape_cast %28 : vector<128xf32> to vector<1x128xf32>
    %c0_16 = arith.constant 0 : index
    %c0_17 = arith.constant 0 : index
    %30 = vector.load %arg7[%c0_16, %c0_17] : memref<1x128xf32, #tpu.memory_space<vmem>>, vector<1x128xf32>
    tpu.vector_store %arg7[%c0_16, %c0_17], %29 {strides = array<i32>} : memref<1x128xf32, #tpu.memory_space<vmem>>, vector<1x128xf32>,
    %31 = tpu.transpose %27, [1, 0] : vector<128x128xf32> -> vector<128x128xf32>
    %cst_18 = arith.constant dense<0x7F800000> : vector<128xf32>
    %32 = vector.multi_reduction <minimumf>, %31, %cst_18 [0] : vector<128x128xf32> to vector<128xf32>
    %33 = vector.shape_cast %32 : vector<128xf32> to vector<1x128xf32>
    %c0_19 = arith.constant 0 : index
    %c0_20 = arith.constant 0 : index
    %34 = vector.load %arg7[%c0_19, %c0_20] : memref<1x128xf32, #tpu.memory_space<vmem>>, vector<1x128xf32>
    %c0_i32 = arith.constant 0 : i32
    %35 = arith.cmpi eq, %arg2, %c0_i32 : i32
    %36 = arith.extui %35 : i1 to i32
    %c0_i32_21 = arith.constant 0 : i32
    %37 = arith.cmpi ne, %36, %c0_i32_21 : i32
    scf.if %37 {
      %c0_28 = arith.constant 0 : index
      %47 = arith.index_cast %arg1 : i32 to index
      %c0_29 = arith.constant 0 : index
      %48 = vector.load %arg5[%c0_28, %47, %c0_29] : memref<1x1x128xf32, #tpu.memory_space<vmem>>, vector<1x1x128xf32>
      %49 = vector.shape_cast %48 : vector<1x1x128xf32> to vector<1x128xf32>
      %50 = vector.shape_cast %33 : vector<1x128xf32> to vector<1x1x128xf32>
      tpu.vector_store %arg5[%c0_28, %47, %c0_29], %50 {strides = array<i32>} : memref<1x1x128xf32, #tpu.memory_space<vmem>>, vector<1x1x128xf32>,
    } else {
    }
    %c0_i32_22 = arith.constant 0 : i32
    %38 = arith.cmpi sgt, %arg2, %c0_i32_22 : i32
    %39 = arith.extui %38 : i1 to i32
    %c0_i32_23 = arith.constant 0 : i32
    %40 = arith.cmpi ne, %39, %c0_i32_23 : i32
    scf.if %40 {
      %c0_28 = arith.constant 0 : index
      %47 = arith.index_cast %arg1 : i32 to index
      %c0_29 = arith.constant 0 : index
      %48 = vector.load %arg5[%c0_28, %47, %c0_29] : memref<1x1x128xf32, #tpu.memory_space<vmem>>, vector<1x1x128xf32>
      %49 = vector.shape_cast %48 : vector<1x1x128xf32> to vector<1x128xf32>
      %50 = arith.minimumf %49, %33 : vector<1x128xf32>
      %c0_30 = arith.constant 0 : index
      %51 = arith.index_cast %arg1 : i32 to index
      %c0_31 = arith.constant 0 : index
      %52 = vector.load %arg5[%c0_30, %51, %c0_31] : memref<1x1x128xf32, #tpu.memory_space<vmem>>, vector<1x1x128xf32>
      %53 = vector.shape_cast %52 : vector<1x1x128xf32> to vector<1x128xf32>
      %54 = vector.shape_cast %50 : vector<1x128xf32> to vector<1x1x128xf32>
      tpu.vector_store %arg5[%c0_30, %51, %c0_31], %54 {strides = array<i32>} : memref<1x1x128xf32, #tpu.memory_space<vmem>>, vector<1x1x128xf32>,
    } else {
    }
    %c0_i32_24 = arith.constant 0 : i32
    %41 = arith.cmpi eq, %arg1, %c0_i32_24 : i32
    %42 = arith.extui %41 : i1 to i32
    %c0_i32_25 = arith.constant 0 : i32
    %43 = arith.cmpi ne, %42, %c0_i32_25 : i32
    scf.if %43 {
      %c0_28 = arith.constant 0 : index
      %47 = arith.index_cast %arg2 : i32 to index
      %c0_29 = arith.constant 0 : index
      %48 = vector.load %arg6[%c0_28, %47, %c0_29] : memref<1x1x128xf32, #tpu.memory_space<vmem>>, vector<1x1x128xf32>
      %49 = vector.shape_cast %48 : vector<1x1x128xf32> to vector<1x128xf32>
      %50 = vector.shape_cast %34 : vector<1x128xf32> to vector<1x1x128xf32>
      tpu.vector_store %arg6[%c0_28, %47, %c0_29], %50 {strides = array<i32>} : memref<1x1x128xf32, #tpu.memory_space<vmem>>, vector<1x1x128xf32>,
    } else {
    }
    %c0_i32_26 = arith.constant 0 : i32
    %44 = arith.cmpi sgt, %arg1, %c0_i32_26 : i32
    %45 = arith.extui %44 : i1 to i32
    %c0_i32_27 = arith.constant 0 : i32
    %46 = arith.cmpi ne, %45, %c0_i32_27 : i32
    scf.if %46 {
      %c0_28 = arith.constant 0 : index
      %47 = arith.index_cast %arg2 : i32 to index
      %c0_29 = arith.constant 0 : index
      %48 = vector.load %arg6[%c0_28, %47, %c0_29] : memref<1x1x128xf32, #tpu.memory_space<vmem>>, vector<1x1x128xf32>
      %49 = vector.shape_cast %48 : vector<1x1x128xf32> to vector<1x128xf32>
      %50 = arith.minimumf %49, %34 : vector<1x128xf32>
      %c0_30 = arith.constant 0 : index
      %51 = arith.index_cast %arg2 : i32 to index
      %c0_31 = arith.constant 0 : index
      %52 = vector.load %arg6[%c0_30, %51, %c0_31] : memref<1x1x128xf32, #tpu.memory_space<vmem>>, vector<1x1x128xf32>
      %53 = vector.shape_cast %52 : vector<1x1x128xf32> to vector<1x128xf32>
      %54 = vector.shape_cast %50 : vector<1x128xf32> to vector<1x1x128xf32>
      tpu.vector_store %arg6[%c0_30, %51, %c0_31], %54 {strides = array<i32>} : memref<1x1x128xf32, #tpu.memory_space<vmem>>, vector<1x1x128xf32>,
    } else {
    }
    return
  }
  func.func @transform_0(%arg0: i32, %arg1: i32, %arg2: i32) -> (i32, i32, i32) {
    %c0_i32 = arith.constant 0 : i32
    %c0_i32_0 = arith.constant 0 : i32
    return %arg0, %arg1, %c0_i32 : i32, i32, i32
  }
  func.func @transform_1(%arg0: i32, %arg1: i32, %arg2: i32) -> (i32, i32, i32) {
    %c0_i32 = arith.constant 0 : i32
    %c0_i32_0 = arith.constant 0 : i32
    return %arg0, %c0_i32, %arg2 : i32, i32, i32
  }
  func.func @transform_2(%arg0: i32, %arg1: i32, %arg2: i32) -> (i32, i32, i32) {
    %c0_i32 = arith.constant 0 : i32
    %c0_i32_0 = arith.constant 0 : i32
    %c0_i32_1 = arith.constant 0 : i32
    return %arg0, %c0_i32, %c0_i32_0 : i32, i32, i32
  }
  func.func @transform_3(%arg0: i32, %arg1: i32, %arg2: i32) -> (i32, i32, i32) {
    %c0_i32 = arith.constant 0 : i32
    %c0_i32_0 = arith.constant 0 : i32
    %c0_i32_1 = arith.constant 0 : i32
    return %arg0, %c0_i32, %c0_i32_0 : i32, i32, i32
  }
}

</mosaic_0001>

<llo_original>
// kernel: chamfer_distance_loss.1
$region0: #{chamfer_distance_loss.1}
  #allocation0 [shape = 'u32[]', space=smem, size = 0x4, offset = 0x4, fixed_abs, tag = 'smem constant byte address 0x4 - core index']
  #allocation1 [shape = 'u32[144,128]{1,0:T(1,128)}', space=vmem, size = 0x12000, scoped, tag = 'internal scratch']
  #allocation2 [shape = 'f32[1,128]{1,0:T(1,128)}', space=vmem, size = 0x200, scoped, tag = 'scratch operand']
  %s0 = inlined_call_operand.vmem [shape: f32[2,128,3], index: 0, kind: input, shape index: {}]
  %s1 = inlined_call_operand.vmem [shape: f32[2,3,128], index: 1, kind: input, shape index: {}]
  %s2 = inlined_call_operand.vmem [shape: f32[2,1,128], index: 2, kind: output, shape index: {0}]
  %s3 = inlined_call_operand.vmem [shape: f32[2,1,128], index: 3, kind: output, shape index: {1}]
  %4 = xla_tuple %s2, %s3
  %s5 = sld [smem:[#allocation0]]
  $region65: #{chamfer_distance_loss.1} parent=0
    _
  %s7 = ssub.s32 1, %s5
  %s8 = scalar_select 0, %s7, %s5
  loop: start=0, step=1, limit=4
  $region2: #{chamfer_distance_loss.1} parent=0 // loop_pre_header
    _
  $region3: #{chamfer_distance_loss.1} parent=0 // loop_header
    %s10 = sphi 0, %s14
    %p11 = scmp.ge.s32.totalorder %s10, 4
    %s17 = sphi 0, %s36
    %s18 = sphi 0, %s32
    %s19 = sphi 0, %s28
    %s20 = sphi 0, %s17
    %s21 = sphi 0, %s18
    %s22 = sphi 0, %s19
    %s23 = sphi 0, %s20
    %s24 = sphi 0, %s21
    %s25 = sphi 0, %s22
    %s41 = sphi 0, %s43
    %s44 = sphi 0, %s41
    %s45 = sphi 0, %s44
    %s61 = sphi 0, %s45
    %s69 = sphi 0, %s71
    %s72 = sphi 0, %s69
    %s73 = sphi 0, %s72
    %s89 = sphi 0, %s73
    %s95 = sphi 0, %s97
    %s98 = sphi 0, %s95
    %s99 = sphi 0, %s98
    %s115 = sphi 0, %s99
    %s121 = sphi 0, %s123
    %s124 = sphi 0, %s121
    %s125 = sphi 0, %s124
    %s141 = sphi 0, %s125
  $region4: #{chamfer_distance_loss.1} parent=0 // loop_header_branch
    %13 = sbr.rel (%p11) target = $region8
  $region5: #{chamfer_distance_loss.1} parent=0 // loop_body
    %s15 = ssub.s32 %s10, 1
    %s16 = ssub.s32 %s10, 2
    %s26 = sadd.s32 1, %s19
    %p27 = scmp.ge.s32.totalorder %s26, 1
    %s28 = scalar_select %p27, 0, %s26
    %s29 = sadd.s32 1, %s18
    %s30 = scalar_select %p27, %s29, %s18
    %p31 = scmp.ge.s32.totalorder %s30, 1
    %s32 = scalar_select %p31, 0, %s30
    %s33 = sadd.s32 1, %s17
    %s34 = scalar_select %p31, %s33, %s17
    %p35 = scmp.ge.s32.totalorder %s34, 2
    %s36 = scalar_select %p35, 0, %s34
    %s37 = ssub.s32 %s17, %s36
    %s38 = ssub.s32 %s18, %s32
    %s39 = sor.u32 %s37, %s38
    %p40 = scmp.eq.s32.totalorder %s39, 0
    %s42 = sadd.s32 %s41, 1
    %s43 = scalar_select %p40, %s41, %s42
    %p46 = pneg %p40
    %p47 = scmp.eq.s32.totalorder %s10, 1
    %p48 = por %p46, %p47
    %p49 = scmp.ne.s32.totalorder %s41, %s44
    %p50 = scmp.eq.s32.totalorder %s10, 0
    %p51 = por %p49, %p50
    %p52 = scmp.ne.s32.totalorder %s41, %s44
    %p53 = scmp.eq.s32.totalorder %s15, 1
    %p54 = por %p52, %p53
    %p55 = scmp.ne.s32.totalorder %s44, %s45
    %p56 = scmp.eq.s32.totalorder %s15, 0
    %p57 = por %p55, %p56
    %p58 = scmp.ne.s32.totalorder %s44, %s45
    %p59 = scmp.eq.s32.totalorder %s16, 1
    %p60 = por %p58, %p59
    %p62 = scmp.ne.s32.totalorder %s45, %s61
    %p63 = scmp.eq.s32.totalorder %s16, 0
    %p64 = por %p62, %p63
    %s65 = ssub.s32 %s17, %s36
    %s66 = ssub.s32 %s19, %s28
    %s67 = sor.u32 %s65, %s66
    %p68 = scmp.eq.s32.totalorder %s67, 0
    %s70 = sadd.s32 %s69, 1
    %s71 = scalar_select %p68, %s69, %s70
    %p74 = pneg %p68
    %p75 = scmp.eq.s32.totalorder %s10, 1
    %p76 = por %p74, %p75
    %p77 = scmp.ne.s32.totalorder %s69, %s72
    %p78 = scmp.eq.s32.totalorder %s10, 0
    %p79 = por %p77, %p78
    %p80 = scmp.ne.s32.totalorder %s69, %s72
    %p81 = scmp.eq.s32.totalorder %s15, 1
    %p82 = por %p80, %p81
    %p83 = scmp.ne.s32.totalorder %s72, %s73
    %p84 = scmp.eq.s32.totalorder %s15, 0
    %p85 = por %p83, %p84
    %p86 = scmp.ne.s32.totalorder %s72, %s73
    %p87 = scmp.eq.s32.totalorder %s16, 1
    %p88 = por %p86, %p87
    %p90 = scmp.ne.s32.totalorder %s73, %s89
    %p91 = scmp.eq.s32.totalorder %s16, 0
    %p92 = por %p90, %p91
    %s93 = ssub.s32 %s17, %s36
    %p94 = scmp.eq.s32.totalorder %s93, 0
    %s96 = sadd.s32 %s95, 1
    %s97 = scalar_select %p94, %s95, %s96
    %p100 = pneg %p94
    %p101 = scmp.eq.s32.totalorder %s10, 1
    %p102 = por %p100, %p101
    %p103 = scmp.ne.s32.totalorder %s95, %s98
    %p104 = scmp.eq.s32.totalorder %s10, 0
    %p105 = por %p103, %p104
    %p106 = scmp.ne.s32.totalorder %s95, %s98
    %p107 = scmp.eq.s32.totalorder %s15, 1
    %p108 = por %p106, %p107
    %p109 = scmp.ne.s32.totalorder %s98, %s99
    %p110 = scmp.eq.s32.totalorder %s15, 0
    %p111 = por %p109, %p110
    %p112 = scmp.ne.s32.totalorder %s98, %s99
    %p113 = scmp.eq.s32.totalorder %s16, 1
    %p114 = por %p112, %p113
    %p116 = scmp.ne.s32.totalorder %s99, %s115
    %p117 = scmp.eq.s32.totalorder %s16, 0
    %p118 = por %p116, %p117
    %s119 = ssub.s32 %s17, %s36
    %p120 = scmp.eq.s32.totalorder %s119, 0
    %s122 = sadd.s32 %s121, 1
    %s123 = scalar_select %p120, %s121, %s122
    %p126 = pneg %p120
    %p127 = scmp.eq.s32.totalorder %s10, 1
    %p128 = por %p126, %p127
    %p129 = scmp.ne.s32.totalorder %s121, %s124
    %p130 = scmp.eq.s32.totalorder %s10, 0
    %p131 = por %p129, %p130
    %p132 = scmp.ne.s32.totalorder %s121, %s124
    %p133 = scmp.eq.s32.totalorder %s15, 1
    %p134 = por %p132, %p133
    %p135 = scmp.ne.s32.totalorder %s124, %s125
    %p136 = scmp.eq.s32.totalorder %s15, 0
    %p137 = por %p135, %p136
    %p138 = scmp.ne.s32.totalorder %s124, %s125
    %p139 = scmp.eq.s32.totalorder %s16, 1
    %p140 = por %p138, %p139
    %p142 = scmp.ne.s32.totalorder %s125, %s141
    %p143 = scmp.eq.s32.totalorder %s16, 0
    %p144 = por %p142, %p143
    %p145 = scmp.le.s32.totalorder 1, %s10
    %p146 = scmp.lt.s32.totalorder %s10, 3
    %p147 = pnand %p145, %p146
    %p148 = pneg %p147
    // Predicated region
    $region9: #{chamfer_distance_loss.1} parent=5 // pred_check
      _
    $region10: #{chamfer_distance_loss.1} parent=5 // pred_check_branch
      %150 = sbr.rel (%p147) target = $region12
    $region11: #{chamfer_distance_loss.1} parent=5 // pred_region
      %s151 = ssub.s32 %s10, 1
    $region12: #{chamfer_distance_loss.1} parent=5 // pred_fallthru
      _
    %p152 = scmp.lt.s32.totalorder %s10, 2
    // Predicated region
    $region13: #{chamfer_distance_loss.1} parent=5 // pred_check
      %p153 = pneg %p152
    $region14: #{chamfer_distance_loss.1} parent=5 // pred_check_branch
      %155 = sbr.rel (%p153) target = $region16
    $region15: #{chamfer_distance_loss.1} parent=5 // pred_region
      // Predicated region
      $region17: #{chamfer_distance_loss.1} parent=15 // pred_check
        %p156 = pneg %p51
      $region18: #{chamfer_distance_loss.1} parent=15 // pred_check_branch
        %158 = sbr.rel (%p156) target = $region20
      $region19: #{chamfer_distance_loss.1} parent=15 // pred_region
        %s159 = smul.u32 16, %s18
        %p160 = scmp.lt.s32.totalorder %s17, 1
        %s161 = scalar_select %p160, %s17, 1
        %p162 = scmp.lt.s32.totalorder %s159, 15
        %s163 = scalar_select %p162, %s159, 15
        %s164 = smul.addr %s161, 16
        %s165 = sadd.s32 %s163, %s164
        %s166 = smul.addr %s165, 8
        %s167 = scalar_lea.vmem %s0, %s166
        %s168 = smul.u32 16, %s18
      $region20: #{chamfer_distance_loss.1} parent=15 // pred_fallthru
        _
      // Predicated region
      $region21: #{chamfer_distance_loss.1} parent=15 // pred_check
        %p169 = pneg %p79
      $region22: #{chamfer_distance_loss.1} parent=15 // pred_check_branch
        %171 = sbr.rel (%p169) target = $region24
      $region23: #{chamfer_distance_loss.1} parent=15 // pred_region
        %p172 = scmp.lt.s32.totalorder %s17, 1
        %s173 = scalar_select %p172, %s17, 1
        %p174 = scmp.lt.s32.totalorder %s19, 0
        %s175 = scalar_select %p174, %s19, 0
        %s176 = sadd.s32 %s175, %s173
        %s177 = smul.addr %s176, 4
        %s178 = scalar_lea.vmem %s1, %s177
      $region24: #{chamfer_distance_loss.1} parent=15 // pred_fallthru
        _
    $region16: #{chamfer_distance_loss.1} parent=5 // pred_fallthru
      _
    %p179 = scmp.le.s32.totalorder 1, %s10
    %p180 = scmp.lt.s32.totalorder %s10, 3
    %p181 = pnand %p179, %p180
    %p182 = pneg %p181
    // Predicated region
    $region25: #{chamfer_distance_loss.1} parent=5 // pred_check
      _
    $region26: #{chamfer_distance_loss.1} parent=5 // pred_check_branch
      %184 = sbr.rel (%p181) target = $region28
    $region27: #{chamfer_distance_loss.1} parent=5 // pred_region
      %s185 = ssub.s32 %s10, 1
      %s186 = smul.u32 16, %s21
      %p187 = scmp.lt.s32.totalorder %s20, 1
      %s188 = scalar_select %p187, %s20, 1
      %p189 = scmp.lt.s32.totalorder %s186, 15
      %s190 = scalar_select %p189, %s186, 15
      %s191 = smul.addr %s188, 16
      %s192 = sadd.s32 %s190, %s191
      %s193 = smul.addr %s192, 8
      %s194 = scalar_lea.vmem %s0, %s193
      %p195 = pneg %p57
      %p196 = pneg %p54
      %p197 = scmp.lt.s32.totalorder %s20, 1
      %s198 = scalar_select %p197, %s20, 1
      %p199 = scmp.lt.s32.totalorder %s22, 0
      %s200 = scalar_select %p199, %s22, 0
      %s201 = sadd.s32 %s200, %s198
      %s202 = smul.addr %s201, 4
      %s203 = scalar_lea.vmem %s1, %s202
      %p204 = pneg %p85
      %p205 = pneg %p82
      %p206 = pneg %p111
      %p207 = pneg %p108
      %p208 = scmp.lt.s32.totalorder %s20, 1
      %s209 = scalar_select %p208, %s20, 1
      %s210 = scalar_lea.vmem %s2, %s209
      %p211 = pneg %p137
      %p212 = pneg %p134
      %p213 = scmp.lt.s32.totalorder %s20, 1
      %s214 = scalar_select %p213, %s20, 1
      %s215 = scalar_lea.vmem %s3, %s214
      %s216 = smul.u32 16, %s21
      %p217 = scmp.lt.s32.totalorder %s20, 1
      %s218 = scalar_select %p217, %s20, 1
      %p219 = scmp.lt.s32.totalorder %s216, 15
      %s220 = scalar_select %p219, %s216, 15
      %s221 = smul.addr %s218, 16
      %s222 = sadd.s32 %s220, %s221
      %s223 = smul.addr %s222, 8
      %s224 = scalar_lea.vmem %s0, %s223
      %s225 = smul.u32 16, %s21
      %p226 = scmp.lt.s32.totalorder %s20, 1
      %s227 = scalar_select %p226, %s20, 1
      %p228 = scmp.lt.s32.totalorder %s22, 0
      %s229 = scalar_select %p228, %s22, 0
      %s230 = sadd.s32 %s229, %s227
      %s231 = smul.addr %s230, 4
      %s232 = scalar_lea.vmem %s1, %s231
      %p233 = scmp.lt.s32.totalorder %s20, 1
      %s234 = scalar_select %p233, %s20, 1
      %s235 = scalar_lea.vmem %s2, %s234
      %p236 = scmp.lt.s32.totalorder %s20, 1
      %s237 = scalar_select %p236, %s20, 1
      %s238 = scalar_lea.vmem %s3, %s237
      %v239 = vld [vmem:[%s224] sm:$0xff]
      %v240 = vld [vmem:[%s224 + $0x8] sm:$0xff]
      %v241 = vld [vmem:[%s224 + $0x10] sm:$0xff]
      %v242 = vld [vmem:[%s224 + $0x18] sm:$0xff]
      %v243 = vld [vmem:[%s224 + $0x20] sm:$0xff]
      %v244 = vld [vmem:[%s224 + $0x28] sm:$0xff]
      %v245 = vld [vmem:[%s224 + $0x30] sm:$0xff]
      %v246 = vld [vmem:[%s224 + $0x38] sm:$0xff]
      %v247 = vld [vmem:[%s224 + $0x40] sm:$0xff]
      %v248 = vld [vmem:[%s224 + $0x48] sm:$0xff]
      %v249 = vld [vmem:[%s224 + $0x50] sm:$0xff]
      %v250 = vld [vmem:[%s224 + $0x58] sm:$0xff]
      %v251 = vld [vmem:[%s224 + $0x60] sm:$0xff]
      %v252 = vld [vmem:[%s224 + $0x68] sm:$0xff]
      %v253 = vld [vmem:[%s224 + $0x70] sm:$0xff]
      %v254 = vld [vmem:[%s224 + $0x78] sm:$0xff]
      %v255 = vld [vmem:[%s232] sm:$0x1]
      %v256 = vld [vmem:[%s232 + $0x1] sm:$0x1]
      %v257 = vld [vmem:[%s232 + $0x2] sm:$0x1]
      %259 = vset.pattern.permute.xlu0 0
      %260 = vperm.xlu0 %259, %v239
      %v261 = vpop.permute.xlu0 %260
      %264 = vset.pattern.permute.xlu0 0
      %265 = vperm.xlu0 %264, %v240
      %v266 = vpop.permute.xlu0 %265
      %269 = vset.pattern.permute.xlu0 0
      %270 = vperm.xlu0 %269, %v241
      %v271 = vpop.permute.xlu0 %270
      %274 = vset.pattern.permute.xlu0 0
      %275 = vperm.xlu0 %274, %v242
      %v276 = vpop.permute.xlu0 %275
      %279 = vset.pattern.permute.xlu0 0
      %280 = vperm.xlu0 %279, %v243
      %v281 = vpop.permute.xlu0 %280
      %284 = vset.pattern.permute.xlu0 0
      %285 = vperm.xlu0 %284, %v244
      %v286 = vpop.permute.xlu0 %285
      %289 = vset.pattern.permute.xlu0 0
      %290 = vperm.xlu0 %289, %v245
      %v291 = vpop.permute.xlu0 %290
      %294 = vset.pattern.permute.xlu0 0
      %295 = vperm.xlu0 %294, %v246
      %v296 = vpop.permute.xlu0 %295
      %299 = vset.pattern.permute.xlu0 0
      %300 = vperm.xlu0 %299, %v247
      %v301 = vpop.permute.xlu0 %300
      %304 = vset.pattern.permute.xlu0 0
      %305 = vperm.xlu0 %304, %v248
      %v306 = vpop.permute.xlu0 %305
      %309 = vset.pattern.permute.xlu0 0
      %310 = vperm.xlu0 %309, %v249
      %v311 = vpop.permute.xlu0 %310
      %314 = vset.pattern.permute.xlu0 0
      %315 = vperm.xlu0 %314, %v250
      %v316 = vpop.permute.xlu0 %315
      %319 = vset.pattern.permute.xlu0 0
      %320 = vperm.xlu0 %319, %v251
      %v321 = vpop.permute.xlu0 %320
      %324 = vset.pattern.permute.xlu0 0
      %325 = vperm.xlu0 %324, %v252
      %v326 = vpop.permute.xlu0 %325
      %329 = vset.pattern.permute.xlu0 0
      %330 = vperm.xlu0 %329, %v253
      %v331 = vpop.permute.xlu0 %330
      %334 = vset.pattern.permute.xlu0 0
      %335 = vperm.xlu0 %334, %v254
      %v336 = vpop.permute.xlu0 %335
      %v338 = vlaneseq
      %v339 = vshrl.u32 %v338, 7
      %v340 = vsub.s32 0, %v339
      %v341 = vrot.slane %v255, %v340
      %v342 = vsub.f32 %v261, %v341
      %v343 = vsub.f32 %v266, %v341
      %v344 = vsub.f32 %v271, %v341
      %v345 = vsub.f32 %v276, %v341
      %v346 = vsub.f32 %v281, %v341
      %v347 = vsub.f32 %v286, %v341
      %v348 = vsub.f32 %v291, %v341
      %v349 = vsub.f32 %v296, %v341
      %v350 = vsub.f32 %v301, %v341
      %v351 = vsub.f32 %v306, %v341
      %v352 = vsub.f32 %v311, %v341
      %v353 = vsub.f32 %v316, %v341
      %v354 = vsub.f32 %v321, %v341
      %v355 = vsub.f32 %v326, %v341
      %v356 = vsub.f32 %v331, %v341
      %v357 = vsub.f32 %v336, %v341
      %358 = vset.pattern.permute.xlu0 1
      %359 = vperm.xlu0 %358, %v239
      %v360 = vpop.permute.xlu0 %359
      %362 = vset.pattern.permute.xlu0 1
      %363 = vperm.xlu0 %362, %v240
      %v364 = vpop.permute.xlu0 %363
      %366 = vset.pattern.permute.xlu0 1
      %367 = vperm.xlu0 %366, %v241
      %v368 = vpop.permute.xlu0 %367
      %370 = vset.pattern.permute.xlu0 1
      %371 = vperm.xlu0 %370, %v242
      %v372 = vpop.permute.xlu0 %371
      %374 = vset.pattern.permute.xlu0 1
      %375 = vperm.xlu0 %374, %v243
      %v376 = vpop.permute.xlu0 %375
      %378 = vset.pattern.permute.xlu0 1
      %379 = vperm.xlu0 %378, %v244
      %v380 = vpop.permute.xlu0 %379
      %382 = vset.pattern.permute.xlu0 1
      %383 = vperm.xlu0 %382, %v245
      %v384 = vpop.permute.xlu0 %383
      %386 = vset.pattern.permute.xlu0 1
      %387 = vperm.xlu0 %386, %v246
      %v388 = vpop.permute.xlu0 %387
      %390 = vset.pattern.permute.xlu0 1
      %391 = vperm.xlu0 %390, %v247
      %v392 = vpop.permute.xlu0 %391
      %394 = vset.pattern.permute.xlu0 1
      %395 = vperm.xlu0 %394, %v248
      %v396 = vpop.permute.xlu0 %395
      %398 = vset.pattern.permute.xlu0 1
      %399 = vperm.xlu0 %398, %v249
      %v400 = vpop.permute.xlu0 %399
      %402 = vset.pattern.permute.xlu0 1
      %403 = vperm.xlu0 %402, %v250
      %v404 = vpop.permute.xlu0 %403
      %406 = vset.pattern.permute.xlu0 1
      %407 = vperm.xlu0 %406, %v251
      %v408 = vpop.permute.xlu0 %407
      %410 = vset.pattern.permute.xlu0 1
      %411 = vperm.xlu0 %410, %v252
      %v412 = vpop.permute.xlu0 %411
      %414 = vset.pattern.permute.xlu0 1
      %415 = vperm.xlu0 %414, %v253
      %v416 = vpop.permute.xlu0 %415
      %418 = vset.pattern.permute.xlu0 1
      %419 = vperm.xlu0 %418, %v254
      %v420 = vpop.permute.xlu0 %419
      %v422 = vlaneseq
      %v423 = vshrl.u32 %v422, 7
      %v424 = vsub.s32 0, %v423
      %v425 = vrot.slane %v256, %v424
      %v426 = vsub.f32 %v360, %v425
      %v427 = vsub.f32 %v364, %v425
      %v428 = vsub.f32 %v368, %v425
      %v429 = vsub.f32 %v372, %v425
      %v430 = vsub.f32 %v376, %v425
      %v431 = vsub.f32 %v380, %v425
      %v432 = vsub.f32 %v384, %v425
      %v433 = vsub.f32 %v388, %v425
      %v434 = vsub.f32 %v392, %v425
      %v435 = vsub.f32 %v396, %v425
      %v436 = vsub.f32 %v400, %v425
      %v437 = vsub.f32 %v404, %v425
      %v438 = vsub.f32 %v408, %v425
      %v439 = vsub.f32 %v412, %v425
      %v440 = vsub.f32 %v416, %v425
      %v441 = vsub.f32 %v420, %v425
      %442 = vset.pattern.permute.xlu0 2
      %443 = vperm.xlu0 %442, %v239
      %v444 = vpop.permute.xlu0 %443
      %446 = vset.pattern.permute.xlu0 2
      %447 = vperm.xlu0 %446, %v240
      %v448 = vpop.permute.xlu0 %447
      %450 = vset.pattern.permute.xlu0 2
      %451 = vperm.xlu0 %450, %v241
      %v452 = vpop.permute.xlu0 %451
      %454 = vset.pattern.permute.xlu0 2
      %455 = vperm.xlu0 %454, %v242
      %v456 = vpop.permute.xlu0 %455
      %458 = vset.pattern.permute.xlu0 2
      %459 = vperm.xlu0 %458, %v243
      %v460 = vpop.permute.xlu0 %459
      %462 = vset.pattern.permute.xlu0 2
      %463 = vperm.xlu0 %462, %v244
      %v464 = vpop.permute.xlu0 %463
      %466 = vset.pattern.permute.xlu0 2
      %467 = vperm.xlu0 %466, %v245
      %v468 = vpop.permute.xlu0 %467
      %470 = vset.pattern.permute.xlu0 2
      %471 = vperm.xlu0 %470, %v246
      %v472 = vpop.permute.xlu0 %471
      %474 = vset.pattern.permute.xlu0 2
      %475 = vperm.xlu0 %474, %v247
      %v476 = vpop.permute.xlu0 %475
      %478 = vset.pattern.permute.xlu0 2
      %479 = vperm.xlu0 %478, %v248
      %v480 = vpop.permute.xlu0 %479
      %482 = vset.pattern.permute.xlu0 2
      %483 = vperm.xlu0 %482, %v249
      %v484 = vpop.permute.xlu0 %483
      %486 = vset.pattern.permute.xlu0 2
      %487 = vperm.xlu0 %486, %v250
      %v488 = vpop.permute.xlu0 %487
      %490 = vset.pattern.permute.xlu0 2
      %491 = vperm.xlu0 %490, %v251
      %v492 = vpop.permute.xlu0 %491
      %494 = vset.pattern.permute.xlu0 2
      %495 = vperm.xlu0 %494, %v252
      %v496 = vpop.permute.xlu0 %495
      %498 = vset.pattern.permute.xlu0 2
      %499 = vperm.xlu0 %498, %v253
      %v500 = vpop.permute.xlu0 %499
      %502 = vset.pattern.permute.xlu0 2
      %503 = vperm.xlu0 %502, %v254
      %v504 = vpop.permute.xlu0 %503
      %v506 = vlaneseq
      %v507 = vshrl.u32 %v506, 7
      %v508 = vsub.s32 0, %v507
      %v509 = vrot.slane %v257, %v508
      %v510 = vsub.f32 %v444, %v509
      %v511 = vsub.f32 %v448, %v509
      %v512 = vsub.f32 %v452, %v509
      %v513 = vsub.f32 %v456, %v509
      %v514 = vsub.f32 %v460, %v509
      %v515 = vsub.f32 %v464, %v509
      %v516 = vsub.f32 %v468, %v509
      %v517 = vsub.f32 %v472, %v509
      %v518 = vsub.f32 %v476, %v509
      %v519 = vsub.f32 %v480, %v509
      %v520 = vsub.f32 %v484, %v509
      %v521 = vsub.f32 %v488, %v509
      %v522 = vsub.f32 %v492, %v509
      %v523 = vsub.f32 %v496, %v509
      %v524 = vsub.f32 %v500, %v509
      %v525 = vsub.f32 %v504, %v509
      %v526 = vmul.f32 %v342, %v342
      %v527 = vmul.f32 %v343, %v343
      %v528 = vmul.f32 %v344, %v344
      %v529 = vmul.f32 %v345, %v345
      %v530 = vmul.f32 %v346, %v346
      %v531 = vmul.f32 %v347, %v347
      %v532 = vmul.f32 %v348, %v348
      %v533 = vmul.f32 %v349, %v349
      %v534 = vmul.f32 %v350, %v350
      %v535 = vmul.f32 %v351, %v351
      %v536 = vmul.f32 %v352, %v352
      %v537 = vmul.f32 %v353, %v353
      %v538 = vmul.f32 %v354, %v354
      %v539 = vmul.f32 %v355, %v355
      %v540 = vmul.f32 %v356, %v356
      %v541 = vmul.f32 %v357, %v357
      %v542 = vmul.f32 %v426, %v426
      %v543 = vmul.f32 %v427, %v427
      %v544 = vmul.f32 %v428, %v428
      %v545 = vmul.f32 %v429, %v429
      %v546 = vmul.f32 %v430, %v430
      %v547 = vmul.f32 %v431, %v431
      %v548 = vmul.f32 %v432, %v432
      %v549 = vmul.f32 %v433, %v433
      %v550 = vmul.f32 %v434, %v434
      %v551 = vmul.f32 %v435, %v435
      %v552 = vmul.f32 %v436, %v436
      %v553 = vmul.f32 %v437, %v437
      %v554 = vmul.f32 %v438, %v438
      %v555 = vmul.f32 %v439, %v439
      %v556 = vmul.f32 %v440, %v440
      %v557 = vmul.f32 %v441, %v441
      %v558 = vadd.f32 %v526, %v542
      %v559 = vadd.f32 %v527, %v543
      %v560 = vadd.f32 %v528, %v544
      %v561 = vadd.f32 %v529, %v545
      %v562 = vadd.f32 %v530, %v546
      %v563 = vadd.f32 %v531, %v547
      %v564 = vadd.f32 %v532, %v548
      %v565 = vadd.f32 %v533, %v549
      %v566 = vadd.f32 %v534, %v550
      %v567 = vadd.f32 %v535, %v551
      %v568 = vadd.f32 %v536, %v552
      %v569 = vadd.f32 %v537, %v553
      %v570 = vadd.f32 %v538, %v554
      %v571 = vadd.f32 %v539, %v555
      %v572 = vadd.f32 %v540, %v556
      %v573 = vadd.f32 %v541, %v557
      %v574 = vmul.f32 %v510, %v510
      %v575 = vmul.f32 %v511, %v511
      %v576 = vmul.f32 %v512, %v512
      %v577 = vmul.f32 %v513, %v513
      %v578 = vmul.f32 %v514, %v514
      %v579 = vmul.f32 %v515, %v515
      %v580 = vmul.f32 %v516, %v516
      %v581 = vmul.f32 %v517, %v517
      %v582 = vmul.f32 %v518, %v518
      %v583 = vmul.f32 %v519, %v519
      %v584 = vmul.f32 %v520, %v520
      %v585 = vmul.f32 %v521, %v521
      %v586 = vmul.f32 %v522, %v522
      %v587 = vmul.f32 %v523, %v523
      %v588 = vmul.f32 %v524, %v524
      %v589 = vmul.f32 %v525, %v525
      %v590 = vadd.f32 %v558, %v574
      %v591 = vadd.f32 %v559, %v575
      %v592 = vadd.f32 %v560, %v576
      %v593 = vadd.f32 %v561, %v577
      %v594 = vadd.f32 %v562, %v578
      %v595 = vadd.f32 %v563, %v579
      %v596 = vadd.f32 %v564, %v580
      %v597 = vadd.f32 %v565, %v581
      %v598 = vadd.f32 %v566, %v582
      %v599 = vadd.f32 %v567, %v583
      %v600 = vadd.f32 %v568, %v584
      %v601 = vadd.f32 %v569, %v585
      %v602 = vadd.f32 %v570, %v586
      %v603 = vadd.f32 %v571, %v587
      %v604 = vadd.f32 %v572, %v588
      %v605 = vadd.f32 %v573, %v589
      %v606 = vmin.f32 %v590, %v594
      %v607 = vmin.f32 %v591, %v595
      %v608 = vmin.f32 %v592, %v596
      %v609 = vmin.f32 %v593, %v597
      %v610 = vmin.f32 %v606, %v598
      %v611 = vmin.f32 %v607, %v599
      %v612 = vmin.f32 %v608, %v600
      %v613 = vmin.f32 %v609, %v601
      %v614 = vmin.f32 %v610, %v602
      %v615 = vmin.f32 %v611, %v603
      %v616 = vmin.f32 %v612, %v604
      %v617 = vmin.f32 %v613, %v605
      %v618 = vmin.f32 %v614, %v615
      %v619 = vmin.f32 %v616, %v617
      %v620 = vmin.f32 %v618, %v619
      %v621 = vrot.slane %v620, 4
      %v622 = vmin.f32 %v620, %v621
      %v623 = vrot.slane %v622, 2
      %v624 = vmin.f32 %v622, %v623
      %v625 = vrot.slane %v624, 1
      %v626 = vmin.f32 %v624, %v625
      %627 = vst [vmem:[#allocation2] sm:$0x1] %v626
      %628 = vxpose.xlu0.b32.start [1/16] %v590, 128
      %629 = vxpose.xlu0.b32.cont [2/16] %v591, 128
      %630 = vxpose.xlu0.b32.cont [3/16] %v592, 128
      %631 = vxpose.xlu0.b32.cont [4/16] %v593, 128
      %632 = vxpose.xlu0.b32.cont [5/16] %v594, 128
      %633 = vxpose.xlu0.b32.cont [6/16] %v595, 128
      %634 = vxpose.xlu0.b32.cont [7/16] %v596, 128
      %635 = vxpose.xlu0.b32.cont [8/16] %v597, 128
      %636 = vxpose.xlu0.b32.cont [9/16] %v598, 128
      %637 = vxpose.xlu0.b32.cont [10/16] %v599, 128
      %638 = vxpose.xlu0.b32.cont [11/16] %v600, 128
      %639 = vxpose.xlu0.b32.cont [12/16] %v601, 128
      %640 = vxpose.xlu0.b32.cont [13/16] %v602, 128
      %641 = vxpose.xlu0.b32.cont [14/16] %v603, 128
      %642 = vxpose.xlu0.b32.cont [15/16] %v604, 128
      %643 = vxpose.xlu0.b32.end [16/16] %v605, 128
      %v644 = vpop.trf.xlu0
      %v645 = vpop.trf.xlu0
      %v646 = vpop.trf.xlu0
      %v647 = vpop.trf.xlu0
      %v648 = vpop.trf.xlu0
      %v649 = vpop.trf.xlu0
      %v650 = vpop.trf.xlu0
      %v651 = vpop.trf.xlu0
      %v652 = vpop.trf.xlu0
      %v653 = vpop.trf.xlu0
      %v654 = vpop.trf.xlu0
      %v655 = vpop.trf.xlu0
      %v656 = vpop.trf.xlu0
      %v657 = vpop.trf.xlu0
      %v658 = vpop.trf.xlu0
      %v659 = vpop.trf.xlu0
      %v660 = vmin.f32 %v644, %v648
      %v661 = vmin.f32 %v645, %v649
      %v662 = vmin.f32 %v646, %v650
      %v663 = vmin.f32 %v647, %v651
      %v664 = vmin.f32 %v660, %v652
      %v665 = vmin.f32 %v661, %v653
      %v666 = vmin.f32 %v662, %v654
      %v667 = vmin.f32 %v663, %v655
      %v668 = vmin.f32 %v664, %v656
      %v669 = vmin.f32 %v665, %v657
      %v670 = vmin.f32 %v666, %v658
      %v671 = vmin.f32 %v667, %v659
      %v672 = vmin.f32 %v668, %v669
      %v673 = vmin.f32 %v670, %v671
      %v674 = vmin.f32 %v672, %v673
      %v675 = vrot.slane %v674, 4
      %v676 = vmin.f32 %v674, %v675
      %v677 = vrot.slane %v676, 2
      %v678 = vmin.f32 %v676, %v677
      %v679 = vrot.slane %v678, 1
      %v680 = vmin.f32 %v678, %v679
      %v681 = vld [vmem:[#allocation2] sm:$0x1]
      %p682 = scmp.eq.s32.totalorder %s22, 0
      // Predicated region
      $region29: #{chamfer_distance_loss.1} parent=27 // pred_check
        %p683 = pneg %p682
      $region30: #{chamfer_distance_loss.1} parent=27 // pred_check_branch
        %685 = sbr.rel (%p683) target = $region32
      $region31: #{chamfer_distance_loss.1} parent=27 // pred_region
        %s686 = scalar_lea.vmem %s235, %s21
        %687 = vst [vmem:[%s686] sm:$0x1] %v680
      $region32: #{chamfer_distance_loss.1} parent=27 // pred_fallthru
        _
      %p688 = scmp.gt.s32.totalorder %s22, 0
      // Predicated region
      $region33: #{chamfer_distance_loss.1} parent=27 // pred_check
        %p689 = pneg %p688
      $region34: #{chamfer_distance_loss.1} parent=27 // pred_check_branch
        %691 = sbr.rel (%p689) target = $region36
      $region35: #{chamfer_distance_loss.1} parent=27 // pred_region
        %s692 = scalar_lea.vmem %s235, %s21
        %v693 = vld [vmem:[%s692] sm:$0x1]
        %v694 = vmin.f32 %v693, %v680
        %695 = vst [vmem:[%s692] sm:$0x1] %v694
      $region36: #{chamfer_distance_loss.1} parent=27 // pred_fallthru
        _
      %p696 = scmp.eq.s32.totalorder %s21, 0
      // Predicated region
      $region37: #{chamfer_distance_loss.1} parent=27 // pred_check
        %p697 = pneg %p696
      $region38: #{chamfer_distance_loss.1} parent=27 // pred_check_branch
        %699 = sbr.rel (%p697) target = $region40
      $region39: #{chamfer_distance_loss.1} parent=27 // pred_region
        %s700 = scalar_lea.vmem %s238, %s22
        %701 = vst [vmem:[%s700] sm:$0x1] %v681
      $region40: #{chamfer_distance_loss.1} parent=27 // pred_fallthru
        _
      %p702 = scmp.gt.s32.totalorder %s21, 0
      // Predicated region
      $region41: #{chamfer_distance_loss.1} parent=27 // pred_check
        %p703 = pneg %p702
      $region42: #{chamfer_distance_loss.1} parent=27 // pred_check_branch
        %705 = sbr.rel (%p703) target = $region44
      $region43: #{chamfer_distance_loss.1} parent=27 // pred_region
        %s706 = scalar_lea.vmem %s238, %s22
        %v707 = vld [vmem:[%s706] sm:$0x1]
        %v708 = vmin.f32 %v707, %v681
        %709 = vst [vmem:[%s706] sm:$0x1] %v708
      $region44: #{chamfer_distance_loss.1} parent=27 // pred_fallthru
        _
      %p710 = scmp.lt.s32.totalorder %s20, 1
      %s711 = scalar_select %p710, %s20, 1
      %s712 = scalar_lea.vmem %s2, %s711
      %p713 = scmp.lt.s32.totalorder %s20, 1
      %s714 = scalar_select %p713, %s20, 1
      %s715 = scalar_lea.vmem %s3, %s714
      // Predicated region
      $region45: #{chamfer_distance_loss.1} parent=27 // pred_check
        %p716 = pneg %p108
      $region46: #{chamfer_distance_loss.1} parent=27 // pred_check_branch
        %718 = sbr.rel (%p716) target = $region48
      $region47: #{chamfer_distance_loss.1} parent=27 // pred_region
        _
      $region48: #{chamfer_distance_loss.1} parent=27 // pred_fallthru
        _
      // Predicated region
      $region49: #{chamfer_distance_loss.1} parent=27 // pred_check
        %p719 = pneg %p134
      $region50: #{chamfer_distance_loss.1} parent=27 // pred_check_branch
        %721 = sbr.rel (%p719) target = $region52
      $region51: #{chamfer_distance_loss.1} parent=27 // pred_region
        _
      $region52: #{chamfer_distance_loss.1} parent=27 // pred_fallthru
        _
    $region28: #{chamfer_distance_loss.1} parent=5 // pred_fallthru
      _
    %p722 = scmp.le.s32.totalorder 2, %s10
    // Predicated region
    $region53: #{chamfer_distance_loss.1} parent=5 // pred_check
      %p723 = pneg %p722
    $region54: #{chamfer_distance_loss.1} parent=5 // pred_check_branch
      %725 = sbr.rel (%p723) target = $region56
    $region55: #{chamfer_distance_loss.1} parent=5 // pred_region
      %s726 = ssub.s32 %s10, 2
      // Predicated region
      $region57: #{chamfer_distance_loss.1} parent=55 // pred_check
        %p727 = pneg %p114
      $region58: #{chamfer_distance_loss.1} parent=55 // pred_check_branch
        %729 = sbr.rel (%p727) target = $region60
      $region59: #{chamfer_distance_loss.1} parent=55 // pred_region
        %p730 = scmp.lt.s32.totalorder %s23, 1
        %s731 = scalar_select %p730, %s23, 1
        %s732 = scalar_lea.vmem %s2, %s731
      $region60: #{chamfer_distance_loss.1} parent=55 // pred_fallthru
        _
      // Predicated region
      $region61: #{chamfer_distance_loss.1} parent=55 // pred_check
        %p733 = pneg %p140
      $region62: #{chamfer_distance_loss.1} parent=55 // pred_check_branch
        %735 = sbr.rel (%p733) target = $region64
      $region63: #{chamfer_distance_loss.1} parent=55 // pred_region
        %p736 = scmp.lt.s32.totalorder %s23, 1
        %s737 = scalar_select %p736, %s23, 1
        %s738 = scalar_lea.vmem %s3, %s737
      $region64: #{chamfer_distance_loss.1} parent=55 // pred_fallthru
        _
    $region56: #{chamfer_distance_loss.1} parent=5 // pred_fallthru
      _
  $region6: #{chamfer_distance_loss.1} parent=0 // loop_footer
    %s14 = sadd.s32 1, %s10
  $region7: #{chamfer_distance_loss.1} parent=0 // loop_footer_branch
    %9 = sbr.rel target = $region3
  $region8: #{chamfer_distance_loss.1} parent=0 // loop_exit
    _

</llo_original>
